<compile_context>
chip_gen: v6e
topology: v6e:2x2x1
jax: 0.10.0
libtpu: 0.0.40
codegen_flags: <defaults>
</compile_context>

<pallas_src>
import functools

import jax
import jax.numpy as jnp
from jax.experimental import pallas as pl
from jax.experimental.pallas import tpu as pltpu


def _static_design_kernel(params_ref, out_ref, *, t):
    # params_ref : VMEM (T, D) -- full learned design table (fits in one tile)
    # out_ref    : VMEM (B, D) -- row t broadcast over the batch
    table = params_ref[...]                                   # (T, D)
    row = jax.lax.slice_in_dim(table, t, t + 1, axis=0)       # (1, D), static
    out_ref[...] = jnp.broadcast_to(row, out_ref.shape)


def static_design_forward(params, designs_history, outcomes):
    """params: (T, D). designs_history: (t, B, D). outcomes: (t, B, ...).

    Returns (B, D) == params[t] broadcast over the batch, matching
    StaticDesignNetwork.forward (outcomes are shape-only / unused)."""
    del outcomes  # forward only uses the shapes of the inputs
    t = designs_history.shape[0]       # static Python int (comes from a shape)
    batch = designs_history.shape[1]
    T, D = params.shape
    assert t < T, "step index must be < T (same constraint as PyTorch indexing)"

    itemsize = jnp.dtype(params.dtype).itemsize
    out = pl.pallas_call(
        functools.partial(_static_design_kernel, t=t),
        out_shape=jax.ShapeDtypeStruct((batch, D), params.dtype),
        # No grid: whole arrays are staged into VMEM once; no pipeline setup.
        in_specs=[pl.BlockSpec(memory_space=pltpu.MemorySpace.VMEM)],
        out_specs=pl.BlockSpec(memory_space=pltpu.MemorySpace.VMEM),
        cost_estimate=pl.CostEstimate(
            flops=0,
            transcendentals=0,
            bytes_accessed=T * D * itemsize + batch * D * itemsize,
        ),
    )(params)
    return out


if __name__ == "__main__":
    # Deterministic synthetic setup (mirrors torch.rand(T, D) * 2 - 1).
    T = 8          # total number of experiment steps
    D = 16         # design_shape (an int in the PyTorch module)
    B = 4          # batch size
    t = 3          # number of past steps already observed (t < T)

    key = jax.random.PRNGKey(0)
    k_params, k_hist, k_out = jax.random.split(key, 3)

    params = jax.random.uniform(
        k_params, (T, D), dtype=jnp.float32, minval=-1.0, maxval=1.0
    )
    designs_history = jax.random.normal(k_hist, (t, B, D), dtype=jnp.float32)
    outcomes = jax.random.normal(k_out, (t, B, 1), dtype=jnp.float32)

    result = static_design_forward(params, designs_history, outcomes)
    result = jax.block_until_ready(result)

    # Reference check against plain-JAX semantics of the PyTorch forward.
    ref = jnp.broadcast_to(params[t][None, :], (B, D))
    assert result.shape == (B, D)
    assert jnp.allclose(result, ref), "kernel output mismatch vs reference"

    print("KERNEL_OK")
</pallas_src>

<mosaic_0001>
module attributes {stable_mosaic.version = 11 : i64} {
  func.func @_static_design_kernel(%arg0: memref<8x16xf32, #tpu.memory_space<vmem>>, %arg1: memref<4x16xf32, #tpu.memory_space<vmem>>) attributes {dimension_semantics = [], scalar_prefetch = 0 : i64, scratch_operands = 0 : i64, tpu.core_type = #tpu.core_type<tc>} {
    %c0 = arith.constant 0 : index
    %c0_0 = arith.constant 0 : index
    %0 = vector.load %arg0[%c0, %c0_0] : memref<8x16xf32, #tpu.memory_space<vmem>>, vector<8x16xf32>
    %1 = vector.extract_strided_slice %0 {offsets = [3, 0], sizes = [1, 16], strides = [1, 1]} : vector<8x16xf32> to vector<1x16xf32>
    %2 = vector.shape_cast %1 : vector<1x16xf32> to vector<1x16xf32>
    %3 = vector.broadcast %2 : vector<1x16xf32> to vector<4x16xf32>
    %c0_1 = arith.constant 0 : index
    %c0_2 = arith.constant 0 : index
    %4 = vector.load %arg1[%c0_1, %c0_2] : memref<4x16xf32, #tpu.memory_space<vmem>>, vector<4x16xf32>
    tpu.vector_store %arg1[%c0_1, %c0_2], %3 {strides = array<i32>} : memref<4x16xf32, #tpu.memory_space<vmem>>, vector<4x16xf32>,
    return
  }
}

</mosaic_0001>

<llo_original>
// kernel: tpu_custom_call.1
$region0: #{tpu_custom_call.1}
  #allocation0 [shape = 'u32[]', space=smem, size = 0x4, offset = 0x4, fixed_abs, tag = 'smem constant byte address 0x4 - core index']
  #allocation1 [shape = 'u32[144,128]{1,0:T(1,128)}', space=vmem, size = 0x12000, scoped, tag = 'internal scratch']
  %s0 = inlined_call_operand.hbm [shape: f32[8,16], index: 0, kind: input, shape index: {}]
  %s1 = inlined_call_operand.hbm [shape: f32[4,16], index: 1, kind: output, shape index: {}]
  %s2 = sld [smem:[#allocation0]]
  $region18: #{tpu_custom_call.1} parent=0
    _
  %s4 = ssub.s32 1, %s2
  %s5 = scalar_select 0, %s4, %s2
  $region1: #{tpu_custom_call.1} parent=0
    #allocation2 [shape = 'u8[4096]{0}', space=vmem, size = 0x1000, scoped, tag = 'input window, operand 0, single buffered']
    #allocation3 [shape = 's32[1]{0}', space=sflag, size = 0x4, scoped, tag = 'scoped memory for tpu_custom_call.1']
    #allocation4 [shape = 's32[1]{0}', space=sflag, size = 0x4, scoped, tag = 'scoped memory for tpu_custom_call.1']
    #allocation5 [shape = 'u8[2048]{0}', space=vmem, size = 0x800, scoped, tag = 'output window, operand 0, single buffered']
    %6 = vsyncpa [#allocation3], 0
    %7 = vsyncpa [#allocation4], 0
    // Predicated region
    $region2: #{tpu_custom_call.1} parent=1 // pred_check
      _
    $region3: #{tpu_custom_call.1} parent=1 // pred_check_branch
      %9 = sbr.rel (0) target = $region5
    $region4: #{tpu_custom_call.1} parent=1 // pred_region
      %s11 = ssub.s32 128, 128
      %12 = vsyncadd [#allocation3], %s11
      %s14 = sshll.u32 [#allocation2], 4
      %s15 = int_to_ptr.vmem [resolvable:$true] %s14
      %17 = dma.hbm_to_vmem [thread:$0]  %s0, 128, %s15, [#allocation3]
    $region5: #{tpu_custom_call.1} parent=1 // pred_fallthru
      _
    // Predicated region
    $region6: #{tpu_custom_call.1} parent=1 // pred_check
      _
    $region7: #{tpu_custom_call.1} parent=1 // pred_check_branch
      %19 = sbr.rel (0) target = $region9
    $region8: #{tpu_custom_call.1} parent=1 // pred_region
      %20 = dma.done [#allocation3], 128
    $region9: #{tpu_custom_call.1} parent=1 // pred_fallthru
      _
    %v21 = vld [vmem:[#allocation2] sm:$0xff]
    %v22 = vlaneseq
    %v23 = vshrl.u32 %v22, 7
    %v24 = vsub.s32 3, %v23
    %v25 = vrot.slane %v21, %v24
    %vm26 = vcmask 125952
    %27 = vst.msk [vmem:[#allocation5] sm:$0xf] %vm26, %v25
    // Predicated region
    $region10: #{tpu_custom_call.1} parent=1 // pred_check
      _
    $region11: #{tpu_custom_call.1} parent=1 // pred_check_branch
      %29 = sbr.rel (0) target = $region13
    $region12: #{tpu_custom_call.1} parent=1 // pred_region
      %s31 = ssub.s32 64, 64
      %32 = vsyncadd [#allocation4], %s31
      %s34 = sshll.u32 [#allocation5], 4
      %s35 = int_to_ptr.vmem [resolvable:$true] %s34
      %37 = dma.vmem_to_hbm [thread:$0]  %s35, 64, %s1, [#allocation4]
    $region13: #{tpu_custom_call.1} parent=1 // pred_fallthru
      _
    // Predicated region
    $region14: #{tpu_custom_call.1} parent=1 // pred_check
      _
    $region15: #{tpu_custom_call.1} parent=1 // pred_check_branch
      %39 = sbr.rel (0) target = $region17
    $region16: #{tpu_custom_call.1} parent=1 // pred_region
      %40 = dma.done [#allocation4], 64
    $region17: #{tpu_custom_call.1} parent=1 // pred_fallthru
      _
    %41 = vsyncpa [#allocation3], 1
    %42 = vsyncpa [#allocation4], 1

</llo_original>
